<compile_context>
chip_gen: v7x
topology: tpu7x:2x2x1
jax: 0.10.0
libtpu: 0.0.40
codegen_flags: <defaults>
</compile_context>

<pallas_src>
import functools

import jax
import jax.numpy as jnp
from jax import lax
from jax.experimental import pallas as pl
from jax.experimental.pallas import tpu as pltpu


def _int_pow(x, n):
    """x**n for a static non-negative integer n via repeated multiplies (VPU only)."""
    n = int(n)
    if n == 0:
        return jnp.ones_like(x)
    result = None
    base = x
    while n > 0:
        if n & 1:
            result = base if result is None else result * base
        n >>= 1
        if n:
            base = base * base
    return result


def _focal_loss_kernel(*refs, gamma, use_alpha, n_valid):
    if use_alpha:
        logits_ref, targets_ref, alpha_ref, out_ref = refs
    else:
        logits_ref, targets_ref, out_ref = refs

    i = pl.program_id(0)

    x = logits_ref[...]                          # (tm, Cpad), native dtype (bf16 stays packed)
    tgt = targets_ref[...]                       # (tm, 1) int32
    tm, c = x.shape

    # ---- row max + target-logit gather in the native dtype (compare + select only) ----
    m = jnp.max(x, axis=-1, keepdims=True)                               # (tm, 1), native
    class_ids = lax.broadcasted_iota(jnp.int32, (tm, c), 1)
    is_tgt = class_ids == tgt                                            # (tm, Cpad) bool
    # exact even in bf16: one non-zero lane per row, adding zeros is lossless
    logit_t = jnp.sum(jnp.where(is_tgt, x, jnp.zeros_like(x)),
                      axis=-1, keepdims=True)                            # (tm, 1), native

    # ---- f32 only from the exp / LSE accumulation onward ----
    e = jnp.exp((x - m).astype(jnp.float32))                             # (tm, Cpad) f32
    lse = m.astype(jnp.float32) + jnp.log(jnp.sum(e, axis=-1, keepdims=True))  # (tm, 1)

    # clamp: rounding can give ce slightly negative -> pt > 1 -> negative focal weight base
    ce = jnp.maximum(lse - logit_t.astype(jnp.float32), 0.0)             # (tm, 1) = -log p_t
    pt = jnp.exp(-ce)

    if use_alpha:
        at = alpha_ref[...]                                              # (tm, 1) f32, pre-gathered
        ce = at * ce

    if float(gamma) == int(gamma) and int(gamma) >= 0:
        w = _int_pow(1.0 - pt, int(gamma))       # VPU multiplies, NaN-safe
    else:
        w = jnp.power(jnp.maximum(1.0 - pt, 0.0), jnp.float32(gamma))
    focal = w * ce                                                       # (tm, 1)

    # mask rows beyond the true batch size (padding added for tiling)
    rows = i * tm + lax.broadcasted_iota(jnp.int32, (tm, 1), 0)
    focal = jnp.where(rows < n_valid, focal, 0.0)

    # one partial sum per tile -> SMEM scalar slot (final reduce happens in JAX)
    out_ref[0, 0] = jnp.sum(focal)


def focal_loss(logits, targets, alpha=None, gamma=3, reduction="mean",
               target_block_bytes=2 * 1024 * 1024):
    """Pallas TPU implementation of FocalLoss.forward ('mean' or 'sum')."""
    n, c = logits.shape
    use_alpha = alpha is not None
    targets = jnp.asarray(targets, dtype=jnp.int32)

    # fp16's min (-65504) is not safely below real logits -> promote to bf16 (same traffic)
    if logits.dtype == jnp.float16:
        logits = logits.astype(jnp.bfloat16)

    # --- lane-dense class dim (no-op when C is already a multiple of 128) ---
    c_pad = pl.cdiv(c, 128) * 128
    if c_pad != c:
        # large negative finite pad (not -inf): padded classes vanish from the softmax
        neg = max(-1e30, float(jnp.finfo(logits.dtype).min))
        logits = jnp.pad(logits, ((0, 0), (0, c_pad - c)), constant_values=neg)

    # --- alpha gathered once in the wrapper: (N, 1) f32 column, 4 B/row of extra traffic ---
    if use_alpha:
        alpha_t = jnp.asarray(alpha, dtype=jnp.float32)[targets].reshape(n, 1)

    # --- row tile: ~2 MiB per (double-buffered) logits block, multiple of 8 sublanes ---
    bytes_per_row = c_pad * logits.dtype.itemsize
    tm = max(8, (target_block_bytes // bytes_per_row) // 8 * 8)
    tm = min(tm, pl.cdiv(n, 8) * 8)            # don't over-tile tiny batches
    num_tiles = pl.cdiv(n, tm)
    # v7x megacore: make sure both TensorCores get a tile when there's enough work
    if num_tiles == 1 and n > 8:
        tm = max(8, pl.cdiv(pl.cdiv(n, 2), 8) * 8)
        num_tiles = pl.cdiv(n, tm)
    n_pad = num_tiles * tm

    if n_pad != n:
        logits = jnp.pad(logits, ((0, n_pad - n), (0, 0)))               # rows masked in-kernel
    tgt2d = targets.reshape(n, 1)
    if n_pad != n:
        tgt2d = jnp.pad(tgt2d, ((0, n_pad - n), (0, 0)))
    if use_alpha and n_pad != n:
        alpha_t = jnp.pad(alpha_t, ((0, n_pad - n), (0, 0)))

    kernel = functools.partial(_focal_loss_kernel, gamma=gamma,
                               use_alpha=use_alpha, n_valid=n)

    in_specs = [
        pl.BlockSpec((tm, c_pad), lambda i: (i, 0)),   # logits tile, caller's dtype
        pl.BlockSpec((tm, 1), lambda i: (i, 0)),       # targets tile
    ]
    inputs = [logits, tgt2d]
    if use_alpha:
        in_specs.append(pl.BlockSpec((tm, 1), lambda i: (i, 0)))  # pre-gathered alpha_t
        inputs.append(alpha_t)

    itemsize = logits.dtype.itemsize
    cost = pl.CostEstimate(
        flops=8 * n_pad * c_pad,
        transcendentals=n_pad * c_pad + 3 * n_pad,      # exp over tiles + exp(-ce), log
        bytes_accessed=(n_pad * c_pad * itemsize + n_pad * 4
                        + (n_pad * 4 if use_alpha else 0) + num_tiles * 4),
    )

    partials = pl.pallas_call(
        kernel,
        out_shape=jax.ShapeDtypeStruct((num_tiles, 1), jnp.float32),
        grid=(num_tiles,),
        in_specs=in_specs,
        out_specs=pl.BlockSpec((1, 1), lambda i: (i, 0),
                               memory_space=pltpu.MemorySpace.SMEM),
        compiler_params=pltpu.CompilerParams(
            # no cross-step state -> grid axis is fully parallel (both v7x TCs stream)
            dimension_semantics=("parallel",),
            # block stays ~2 MiB so v7x's 64 MiB VMEM is never in danger
            vmem_limit_bytes=32 * 1024 * 1024,
        ),
        cost_estimate=cost,
    )(*inputs)

    total = jnp.sum(partials)
    if reduction == "mean":
        return total / jnp.float32(n)
    elif reduction == "sum":
        return total
    else:
        # TODO(synk): reduction='none' needs a per-sample (N,) output spec instead of partial sums.
        raise NotImplementedError("reduction='none' is not implemented in the Pallas kernel")


def _focal_loss_ref(logits, targets, alpha=None, gamma=3, reduction="mean"):
    # pure-JAX reference matching the PyTorch module
    logp = jax.nn.log_softmax(logits.astype(jnp.float32), axis=-1)
    ce = -jnp.take_along_axis(logp, targets[:, None], axis=-1)[:, 0]
    pt = jnp.exp(-ce)
    if alpha is not None:
        ce = alpha[targets] * ce
    focal = (1.0 - pt) ** gamma * ce
    return jnp.mean(focal) if reduction == "mean" else jnp.sum(focal)


if __name__ == "__main__":
    key = jax.random.PRNGKey(0)
    k1, k2, k3, k4, k5 = jax.random.split(key, 5)

    # --- small case: batch=8 samples, 10 classes, f32 + alpha, reduction='mean' ---
    N, C = 8, 10
    logits = jax.random.normal(k1, (N, C), dtype=jnp.float32)
    targets = jax.random.randint(k2, (N,), 0, C, dtype=jnp.int32)
    alpha = jax.random.uniform(k3, (C,), dtype=jnp.float32, minval=0.5, maxval=1.5)

    out = focal_loss(logits, targets, alpha=alpha, gamma=3, reduction="mean")
    out = jax.block_until_ready(out)
    ref = _focal_loss_ref(logits, targets, alpha=alpha, gamma=3)
    assert jnp.allclose(out, ref, rtol=1e-5, atol=1e-6), (out, ref)

    # --- bf16 (native-dtype HBM traffic, bf16 VALU staging), no-alpha, 'sum' ---
    logits_bf16 = logits.astype(jnp.bfloat16)
    out2 = focal_loss(logits_bf16, targets, alpha=None, gamma=3, reduction="sum")
    out2 = jax.block_until_ready(out2)
    ref2 = _focal_loss_ref(logits_bf16.astype(jnp.float32), targets, alpha=None,
                           gamma=3, reduction="sum")
    assert jnp.allclose(out2, ref2, rtol=2e-2, atol=2e-3), (out2, ref2)

    # --- multi-tile case (exercises row padding, masking, >=2 tiles for v7x) ---
    N2 = 40
    logits3 = jax.random.normal(k4, (N2, C), dtype=jnp.float32)
    targets3 = jax.random.randint(k5, (N2,), 0, C, dtype=jnp.int32)
    out3 = focal_loss(logits3, targets3, alpha=alpha, gamma=3, reduction="mean")
    out3 = jax.block_until_ready(out3)
    ref3 = _focal_loss_ref(logits3, targets3, alpha=alpha, gamma=3)
    assert jnp.allclose(out3, ref3, rtol=1e-5, atol=1e-6), (out3, ref3)

    print("KERNEL_OK")
</pallas_src>

<mosaic_0001>
module attributes {stable_mosaic.version = 11 : i64} {
  func.func @_focal_loss_kernel(%arg0: i32, %arg1: memref<8x128xf32, #tpu.memory_space<vmem>>, %arg2: memref<8x1xi32, #tpu.memory_space<vmem>>, %arg3: memref<8x1xf32, #tpu.memory_space<vmem>>, %arg4: memref<1x1xf32, #tpu.memory_space<smem>>) attributes {dimension_semantics = [#tpu.dimension_semantics<parallel>], iteration_bounds = array<i64: 1>, scalar_prefetch = 0 : i64, scratch_operands = 0 : i64, tpu.core_type = #tpu.core_type<tc>, window_params = [{transform_indices = @transform_0, window_bounds = array<i64: 8, 128>}, {transform_indices = @transform_1, window_bounds = array<i64: 8, 1>}, {transform_indices = @transform_2, window_bounds = array<i64: 8, 1>}, {transform_indices = @transform_3, window_bounds = array<i64: 1, 1>}]} {
    %c0 = arith.constant 0 : index
    %c0_0 = arith.constant 0 : index
    %0 = vector.load %arg1[%c0, %c0_0] : memref<8x128xf32, #tpu.memory_space<vmem>>, vector<8x128xf32>
    %c0_1 = arith.constant 0 : index
    %c0_2 = arith.constant 0 : index
    %1 = vector.load %arg2[%c0_1, %c0_2] : memref<8x1xi32, #tpu.memory_space<vmem>>, vector<8x1xi32>
    %cst = arith.constant dense<0xFF800000> : vector<8xf32>
    %2 = vector.multi_reduction <maximumf>, %0, %cst [1] : vector<8x128xf32> to vector<8xf32>
    %3 = vector.shape_cast %2 : vector<8xf32> to vector<8x1xf32>
    %4 = tpu.iota {dimensions = array<i32: 1>} : vector<8x128xi32>
    %5 = vector.broadcast %1 : vector<8x1xi32> to vector<8x128xi32>
    %6 = arith.cmpi eq, %4, %5 : vector<8x128xi32>
    %cst_3 = arith.constant 0.000000e+00 : f32
    %7 = vector.broadcast %cst_3 : f32 to vector<8x128xf32>
    %8 = arith.select %6, %0, %7 : vector<8x128xi1>, vector<8x128xf32>
    %cst_4 = arith.constant dense<0.000000e+00> : vector<8xf32>
    %9 = vector.multi_reduction <add>, %8, %cst_4 [1] : vector<8x128xf32> to vector<8xf32>
    %10 = vector.shape_cast %9 : vector<8xf32> to vector<8x1xf32>
    %11 = vector.broadcast %3 : vector<8x1xf32> to vector<8x128xf32>
    %12 = arith.subf %0, %11 : vector<8x128xf32>
    %13 = math.exp %12 : vector<8x128xf32>
    %cst_5 = arith.constant dense<0.000000e+00> : vector<8xf32>
    %14 = vector.multi_reduction <add>, %13, %cst_5 [1] : vector<8x128xf32> to vector<8xf32>
    %15 = vector.shape_cast %14 : vector<8xf32> to vector<8x1xf32>
    %16 = math.log %15 : vector<8x1xf32>
    %17 = arith.addf %3, %16 : vector<8x1xf32>
    %18 = arith.subf %17, %10 : vector<8x1xf32>
    %cst_6 = arith.constant 0.000000e+00 : f32
    %19 = vector.broadcast %cst_6 : f32 to vector<8x1xf32>
    %20 = arith.maximumf %18, %19 : vector<8x1xf32>
    %cst_7 = arith.constant 0.000000e+00 : f32
    %21 = vector.broadcast %cst_7 : f32 to vector<8x1xf32>
    %22 = arith.subf %21, %20 : vector<8x1xf32>
    %23 = math.exp %22 : vector<8x1xf32>
    %c0_8 = arith.constant 0 : index
    %c0_9 = arith.constant 0 : index
    %24 = vector.load %arg3[%c0_8, %c0_9] : memref<8x1xf32, #tpu.memory_space<vmem>>, vector<8x1xf32>
    %25 = arith.mulf %24, %20 : vector<8x1xf32>
    %cst_10 = arith.constant 1.000000e+00 : f32
    %26 = vector.broadcast %cst_10 : f32 to vector<8x1xf32>
    %27 = arith.subf %26, %23 : vector<8x1xf32>
    %28 = arith.mulf %27, %27 : vector<8x1xf32>
    %29 = arith.mulf %27, %28 : vector<8x1xf32>
    %30 = arith.mulf %29, %25 : vector<8x1xf32>
    %c8_i32 = arith.constant 8 : i32
    %31 = arith.muli %arg0, %c8_i32 : i32
    %32 = tpu.iota {dimensions = array<i32: 0>} : vector<8x1xi32>
    %33 = vector.broadcast %31 : i32 to vector<8x1xi32>
    %34 = arith.addi %33, %32 : vector<8x1xi32>
    %c8_i32_11 = arith.constant 8 : i32
    %35 = vector.broadcast %c8_i32_11 : i32 to vector<8x1xi32>
    %36 = arith.cmpi slt, %34, %35 : vector<8x1xi32>
    %cst_12 = arith.constant 0.000000e+00 : f32
    %37 = vector.broadcast %cst_12 : f32 to vector<8x1xf32>
    %38 = arith.select %36, %30, %37 : vector<8x1xi1>, vector<8x1xf32>
    %39 = vector.shape_cast %38 : vector<8x1xf32> to vector<1x8x1xf32>
    %cst_13 = arith.constant dense<0.000000e+00> : vector<1xf32>
    %40 = vector.multi_reduction <add>, %39, %cst_13 [1, 2] : vector<1x8x1xf32> to vector<1xf32>
    %41 = vector.shape_cast %40 : vector<1xf32> to vector<1x1x1xf32>
    %42 = vector.extract %41[0, 0, 0] : f32 from vector<1x1x1xf32>
    %c0_14 = arith.constant 0 : index
    %c0_15 = arith.constant 0 : index
    %43 = memref.load %arg4[%c0_14, %c0_15] : memref<1x1xf32, #tpu.memory_space<smem>>
    memref.store %42, %arg4[%c0_14, %c0_15] : memref<1x1xf32, #tpu.memory_space<smem>>
    return
  }
  func.func @transform_0(%arg0: i32) -> (i32, i32) {
    %c0_i32 = arith.constant 0 : i32
    %c0_i32_0 = arith.constant 0 : i32
    return %arg0, %c0_i32 : i32, i32
  }
  func.func @transform_1(%arg0: i32) -> (i32, i32) {
    %c0_i32 = arith.constant 0 : i32
    %c0_i32_0 = arith.constant 0 : i32
    return %arg0, %c0_i32 : i32, i32
  }
  func.func @transform_2(%arg0: i32) -> (i32, i32) {
    %c0_i32 = arith.constant 0 : i32
    %c0_i32_0 = arith.constant 0 : i32
    return %arg0, %c0_i32 : i32, i32
  }
  func.func @transform_3(%arg0: i32) -> (i32, i32) {
    %c0_i32 = arith.constant 0 : i32
    %c0_i32_0 = arith.constant 0 : i32
    return %arg0, %c0_i32 : i32, i32
  }
}

</mosaic_0001>

<llo_original>
// kernel: tpu_custom_call.1
$region0: #{tpu_custom_call.1}
  #allocation0 [shape = 'u32[]', space=smem, size = 0x4, offset = 0x4, fixed_abs, tag = 'smem constant byte address 0x4 - core index']
  #allocation1 [shape = 'u32[144,128]{1,0:T(1,128)}', space=vmem, size = 0x12000, scoped, tag = 'internal scratch']
  %s0 = inlined_call_operand.vmem [shape: f32[8,128], index: 0, kind: input, shape index: {}]
  %s1 = inlined_call_operand.vmem [shape: s32[8,1], index: 1, kind: input, shape index: {}]
  %s2 = inlined_call_operand.vmem [shape: f32[8,1], index: 2, kind: input, shape index: {}]
  %s3 = inlined_call_operand.hbm [shape: f32[1,1], index: 3, kind: output, shape index: {}]
  %s4 = sld [smem:[#allocation0]]
  $region22: #{tpu_custom_call.1} parent=0
    _
  %s6 = ssub.s32 1, %s4
  %s7 = scalar_select 0, %s6, %s4
  $region1: #{tpu_custom_call.1} parent=0
    #allocation2 [shape = 'u8[512]{0}', space=smem, size = 0x200, scoped, tag = 'output window, operand 0, single buffered']
    #allocation3 [shape = 's32[1]{0}', space=sflag, size = 0x4, scoped, tag = 'scoped memory for tpu_custom_call.1']
    %8 = vsyncpa [#allocation3], 0
    // Predicated region
    $region2: #{tpu_custom_call.1} parent=1 // pred_check
      _
    $region3: #{tpu_custom_call.1} parent=1 // pred_check_branch
      %10 = sbr.rel (0) target = $region5
    $region4: #{tpu_custom_call.1} parent=1 // pred_region
      _
    $region5: #{tpu_custom_call.1} parent=1 // pred_fallthru
      _
    // Predicated region
    $region6: #{tpu_custom_call.1} parent=1 // pred_check
      _
    $region7: #{tpu_custom_call.1} parent=1 // pred_check_branch
      %12 = sbr.rel (0) target = $region9
    $region8: #{tpu_custom_call.1} parent=1 // pred_region
      _
    $region9: #{tpu_custom_call.1} parent=1 // pred_fallthru
      _
    // Predicated region
    $region10: #{tpu_custom_call.1} parent=1 // pred_check
      _
    $region11: #{tpu_custom_call.1} parent=1 // pred_check_branch
      %14 = sbr.rel (0) target = $region13
    $region12: #{tpu_custom_call.1} parent=1 // pred_region
      _
    $region13: #{tpu_custom_call.1} parent=1 // pred_fallthru
      _
    %v15 = vld [vmem:[%s0] sm:$0xff]
    %v16 = vld [vmem:[%s1] sm:$0xff]
    %17 = vmax.xlane.f32.xlu0 %v15
    %v18 = vpop.xlane.xlu0 %17
    %v19 = vlaneseq
    %v20 = vand.u32 %v19, 127
    %21 = vset.pattern.permute.xlu0 0
    %22 = vperm.xlu0 %21, %v16
    %v23 = vpop.permute.xlu0 %22
    %vm24 = vcmp.eq.s32.totalorder %v20, %v23
    %v25 = vsel %vm24, %v15, 0.0
    %26 = vadd.xlane.f32.xlu0 %v25
    %v27 = vpop.xlane.xlu0 %26
    %v28 = vsub.f32 %v15, %v18
    %v29 = vmul.f32 %v28, 1.442695
    %v30 = vpow.pop %v29
    %31 = vadd.xlane.f32.xlu0 %v30
    %v32 = vpop.xlane.xlu0 %31
    %v33 = vlog2.pop %v32
    %v34 = vmul.f32 %v33, 0.6931472
    %v35 = vadd.f32 %v18, %v34
    %v36 = vsub.f32 %v35, %v27
    %v37 = vmax.f32 %v36, 0.0
    %v38 = vsub.f32 0.0, %v37
    %v39 = vmul.f32 %v38, 1.442695
    %v40 = vpow.pop %v39
    %v41 = vld [vmem:[%s2] sm:$0xff]
    %v42 = vmul.f32 %v41, %v37
    %v43 = vsub.f32 1.0, %v40
    %v44 = vmul.f32 %v43, %v43
    %v45 = vmul.f32 %v43, %v44
    %v46 = vmul.f32 %v45, %v42
    %s47 = smul.u32 0, 8
    %v48 = vlaneseq
    %v49 = vshrl.u32 %v48, 7
    %v50 = vstv %s47
    %v51 = vadd.s32 %v50, %v49
    %vm52 = vcmp.lt.s32.totalorder %v51, 8
    %v53 = vsel %vm52, %v46, 0.0
    %vm54 = vcmask 7168
    %v55 = vsel %vm54, %v53, 0.0
    %56 = vadd.xlane.f32.xlu0 %v55
    %v57 = vpop.xlane.xlu0 %56
    %v58 = vrot.slane %v57, 4
    %v59 = vadd.f32 %v57, %v58
    %v60 = vrot.slane %v59, 2
    %v61 = vadd.f32 %v59, %v60
    %v62 = vrot.slane %v61, 1
    %v63 = vadd.f32 %v61, %v62
    %s64 = vtos %v63
    %s65 = scalar_lea.smem [#allocation2], 0
    %66 = sst [smem:[%s65]] %s64
    // Predicated region
    $region14: #{tpu_custom_call.1} parent=1 // pred_check
      _
    $region15: #{tpu_custom_call.1} parent=1 // pred_check_branch
      %68 = sbr.rel (0) target = $region17
    $region16: #{tpu_custom_call.1} parent=1 // pred_region
      %s70 = ssub.s32 16, 16
      %71 = vsyncadd [#allocation3], %s70
      %74 = dma.smem_to_hbm [#allocation2], 16, %s3, [#allocation3]
    $region17: #{tpu_custom_call.1} parent=1 // pred_fallthru
      _
    // Predicated region
    $region18: #{tpu_custom_call.1} parent=1 // pred_check
      _
    $region19: #{tpu_custom_call.1} parent=1 // pred_check_branch
      %76 = sbr.rel (0) target = $region21
    $region20: #{tpu_custom_call.1} parent=1 // pred_region
      %77 = dma.done [#allocation3], 16
    $region21: #{tpu_custom_call.1} parent=1 // pred_fallthru
      _
    %78 = sfence
    %79 = vsyncpa [#allocation3], 1

</llo_original>
